<compile_context>
chip_gen: v5e
topology: v5e:2x2
jax: 0.10.0
libtpu: 0.0.40
codegen_flags: <defaults>
</compile_context>

<pallas_src>
import functools

import jax
import jax.numpy as jnp
from jax.experimental import pallas as pl
from jax.experimental.pallas import tpu as pltpu

_LANE = 128


# ----------------------------------------------------------------------------
# VMEM / chip accounting helpers
# ----------------------------------------------------------------------------
def _roundup(v, m):
    return ((v + m - 1) // m) * m


def _sublane(dtype):
    # 32-bit -> 8 sublanes, 16-bit -> 16, 8-bit -> 32 (sub-32-bit packs along sublanes).
    itemsize = jnp.dtype(dtype).itemsize
    return max(8, (32 // (8 * itemsize)) * 8)


def _tile_bytes(rows, cols, dtype):
    """VMEM footprint of a (rows, cols) slab after (sublane, 128) tile padding."""
    return (_roundup(rows, _sublane(dtype)) * _roundup(cols, _LANE)
            * jnp.dtype(dtype).itemsize)


def _chip_info():
    """Return (vmem_capacity_bytes, multi_tensorcore, per-kernel block budget)."""
    vmem_cap = None
    try:
        vmem_cap = int(pltpu.get_tpu_info().vmem_capacity_bytes)
    except Exception:
        vmem_cap = None
    kind = ""
    try:
        kind = jax.devices()[0].device_kind.lower()
    except Exception:
        pass
    # v7x: 2 TensorCores/chip, 64 MiB VMEM per TC (v5e/v6e: 1 TC, 128 MiB).
    multi_tc = ("v7" in kind) or (vmem_cap is not None and vmem_cap <= (64 << 20))
    if vmem_cap is None:
        vmem_cap = 64 << 20  # conservative default (smallest across v5e/v6e/v7x)
    if vmem_cap <= (64 << 20):        # v7x-class
        budget = 24 << 20
    elif "v5" in kind:                # v5e
        budget = 16 << 20
    else:                             # v6e (and other 128 MiB-VMEM chips)
        budget = 40 << 20
    return vmem_cap, multi_tc, budget


def _pick_tb(B, per_b_bytes, budget, multi_tc):
    """Largest batch slab whose double-buffered (in+out) blocks fit `budget`.
    On 2-TensorCore chips keep >=4 grid steps so the 'parallel' axis feeds both
    cores and still has something to pipeline."""
    tb = int(max(1, min(B, budget // (2 * per_b_bytes))))
    if multi_tc and B >= 2:
        target_steps = 4 if B >= 4 else 2
        tb = min(tb, -(-B // target_steps))
    return max(1, tb)


# ----------------------------------------------------------------------------
# Kernel: one (tb, H, W) input block -> one (tb, H+2p, W+2p) output block
# ----------------------------------------------------------------------------
def _custom_pad_kernel(x_ref, o_ref, *, p):
    tb, H, W = x_ref.shape
    Wo = W + 2 * p
    x = x_ref[...]
    # Circular wrap along W (lane axis): [x[..., W-p:], x, x[..., :p]].
    center = jnp.concatenate([x[:, :, W - p:], x, x[:, :, :p]], axis=-1)
    # Constant-zero border along H (sublane axis), assembled so the whole output
    # block is written exactly once with a single aligned full-block store.
    zrows = jnp.zeros((tb, p, Wo), dtype=x.dtype)
    o_ref[...] = jnp.concatenate([zrows, center, zrows], axis=1)


# ----------------------------------------------------------------------------
# Wrapper
# ----------------------------------------------------------------------------
def custom_pad2d_learn_land(x, kern_size, block_batch=None):
    """x: (N, C, H, W) -> (N, C, H+2p, W+2p), p = (kern_size-1)//2.
    Semantics: F.pad(..., mode='circular') along W, then constant-zero pad along H."""
    p = (kern_size - 1) // 2
    N, C, H, W = x.shape
    if p == 0:
        return x
    assert p <= W, "circular padding width must not exceed W"

    B = N * C
    Ho, Wo = H + 2 * p, W + 2 * p
    x2 = x.reshape(B, H, W)

    dtype = x.dtype
    itemsize = jnp.dtype(dtype).itemsize
    vmem_cap, multi_tc, budget = _chip_info()
    # Tiling-aware per-batch-element footprint (input block + output block).
    per_b = _tile_bytes(H, W, dtype) + _tile_bytes(Ho, Wo, dtype)
    if block_batch is not None:
        tb = max(1, min(int(block_batch), B))
    else:
        tb = _pick_tb(B, per_b, budget, multi_tc)
    grid = (pl.cdiv(B, tb),)  # partial last block is masked by Pallas

    working = 2 * tb * per_b  # double-buffered in + out blocks
    vmem_limit = int(min(0.85 * vmem_cap, working + (16 << 20)))

    out = pl.pallas_call(
        functools.partial(_custom_pad_kernel, p=p),
        out_shape=jax.ShapeDtypeStruct((B, Ho, Wo), dtype),
        grid=grid,
        in_specs=[pl.BlockSpec((tb, H, W), lambda i: (i, 0, 0))],
        out_specs=pl.BlockSpec((tb, Ho, Wo), lambda i: (i, 0, 0)),
        compiler_params=pltpu.CompilerParams(
            dimension_semantics=("parallel",),
            vmem_limit_bytes=vmem_limit,
        ),
        cost_estimate=pl.CostEstimate(
            flops=0,
            transcendentals=0,
            bytes_accessed=(B * H * W + B * Ho * Wo) * itemsize,
        ),
    )(x2)
    return out.reshape(N, C, Ho, Wo)


# ----------------------------------------------------------------------------
if __name__ == "__main__":
    kern_size = 3
    N, C, H, W = 2, 4, 16, 16
    p = (kern_size - 1) // 2

    key = jax.random.PRNGKey(0)
    x = jax.random.normal(key, (N, C, H, W), jnp.float32)

    fwd = jax.jit(functools.partial(custom_pad2d_learn_land, kern_size=kern_size))
    out = fwd(x)
    jax.block_until_ready(out)

    assert out.shape == (N, C, H + 2 * p, W + 2 * p), out.shape
    assert out.dtype == x.dtype

    # Reference: circular along W, then constant-zero along H (same order as F.pad calls).
    ref = jnp.pad(x, ((0, 0), (0, 0), (0, 0), (p, p)), mode="wrap")
    ref = jnp.pad(ref, ((0, 0), (0, 0), (p, p), (0, 0)), mode="constant")
    assert jnp.allclose(out, ref), float(jnp.max(jnp.abs(out - ref)))

    # Also exercise the cdiv / masked partial-block path (slab that doesn't divide N*C).
    fwd_uneven = jax.jit(functools.partial(
        custom_pad2d_learn_land, kern_size=kern_size, block_batch=3))
    out2 = fwd_uneven(x)
    jax.block_until_ready(out2)
    assert jnp.allclose(out2, ref), float(jnp.max(jnp.abs(out2 - ref)))

    print("KERNEL_OK")
</pallas_src>

<mosaic_0001>
module attributes {stable_mosaic.version = 11 : i64} {
  func.func @_custom_pad_kernel(%arg0: i32, %arg1: memref<8x16x16xf32, #tpu.memory_space<vmem>>, %arg2: memref<8x18x18xf32, #tpu.memory_space<vmem>>) attributes {dimension_semantics = [#tpu.dimension_semantics<parallel>], iteration_bounds = array<i64: 1>, scalar_prefetch = 0 : i64, scratch_operands = 0 : i64, tpu.core_type = #tpu.core_type<tc>, window_params = [{transform_indices = @transform_0, window_bounds = array<i64: 8, 16, 16>}, {transform_indices = @transform_1, window_bounds = array<i64: 8, 18, 18>}]} {
    %c0 = arith.constant 0 : index
    %c0_0 = arith.constant 0 : index
    %c0_1 = arith.constant 0 : index
    %0 = vector.load %arg1[%c0, %c0_0, %c0_1] : memref<8x16x16xf32, #tpu.memory_space<vmem>>, vector<8x16x16xf32>
    %1 = vector.extract_strided_slice %0 {offsets = [0, 0, 15], sizes = [8, 16, 1], strides = [1, 1, 1]} : vector<8x16x16xf32> to vector<8x16x1xf32>
    %2 = vector.extract_strided_slice %0 {offsets = [0, 0, 0], sizes = [8, 16, 1], strides = [1, 1, 1]} : vector<8x16x16xf32> to vector<8x16x1xf32>
    %3 = tpu.concatenate %1, %0, %2 in 2 : vector<8x16x1xf32>, vector<8x16x16xf32>, vector<8x16x1xf32> -> vector<8x16x18xf32>
    %cst = arith.constant 0.000000e+00 : f32
    %4 = vector.broadcast %cst : f32 to vector<8x1x18xf32>
    %5 = tpu.concatenate %4, %3, %4 in 1 : vector<8x1x18xf32>, vector<8x16x18xf32>, vector<8x1x18xf32> -> vector<8x18x18xf32>
    %c0_2 = arith.constant 0 : index
    %c0_3 = arith.constant 0 : index
    %c0_4 = arith.constant 0 : index
    %6 = vector.load %arg2[%c0_2, %c0_3, %c0_4] : memref<8x18x18xf32, #tpu.memory_space<vmem>>, vector<8x18x18xf32>
    tpu.vector_store %arg2[%c0_2, %c0_3, %c0_4], %5 {strides = array<i32>} : memref<8x18x18xf32, #tpu.memory_space<vmem>>, vector<8x18x18xf32>,
    return
  }
  func.func @transform_0(%arg0: i32) -> (i32, i32, i32) {
    %c0_i32 = arith.constant 0 : i32
    %c0_i32_0 = arith.constant 0 : i32
    %c0_i32_1 = arith.constant 0 : i32
    return %arg0, %c0_i32, %c0_i32_0 : i32, i32, i32
  }
  func.func @transform_1(%arg0: i32) -> (i32, i32, i32) {
    %c0_i32 = arith.constant 0 : i32
    %c0_i32_0 = arith.constant 0 : i32
    %c0_i32_1 = arith.constant 0 : i32
    return %arg0, %c0_i32, %c0_i32_0 : i32, i32, i32
  }
}

</mosaic_0001>

<llo_original>
// kernel: custom_pad2d_learn_land.1
$region0: #{custom_pad2d_learn_land.1}
  #allocation0 [shape = 'u32[]', space=smem, size = 0x4, offset = 0x4, fixed_abs, tag = 'smem constant byte address 0x4 - core index']
  #allocation1 [shape = 'u32[72,128]{1,0:T(1,128)}', space=vmem, size = 0x9000, scoped, tag = 'internal scratch']
  %s0 = inlined_call_operand.hbm [shape: f32[8,16,16], index: 0, kind: input, shape index: {}]
  %s1 = inlined_call_operand.vmem [shape: f32[8,18,18], index: 1, kind: output, shape index: {}]
  %s2 = sld [smem:[#allocation0]]
  $region18: #{custom_pad2d_learn_land.1} parent=0
    _
  %s4 = ssub.s32 1, %s2
  %s5 = scalar_select 0, %s4, %s2
  $region1: #{custom_pad2d_learn_land.1} parent=0
    #allocation2 [shape = 'u8[65536]{0}', space=vmem, size = 0x10000, scoped, tag = 'input window, operand 0, single buffered']
    #allocation3 [shape = 's32[1]{0}', space=sflag, size = 0x4, scoped, tag = 'scoped memory for custom_pad2d_learn_land.1']
    %6 = vsyncpa [#allocation3], 0
    // Predicated region
    $region2: #{custom_pad2d_learn_land.1} parent=1 // pred_check
      _
    $region3: #{custom_pad2d_learn_land.1} parent=1 // pred_check_branch
      %8 = sbr.rel (0) target = $region5
    $region4: #{custom_pad2d_learn_land.1} parent=1 // pred_region
      %10 = vsyncadd [#allocation3], 0
      %s11 = sshll.u32 %s0, 4
      %s12 = int_to_ptr.hbm [resolvable:$true] %s11
      %s13 = sshll.u32 [#allocation2], 4
      %s14 = int_to_ptr.vmem [resolvable:$true] %s13
      %19 = dma.hbm_to_vmem [thread:$0]  %s12, 2048, %s14, [#allocation3], 128, 128, 8
    $region5: #{custom_pad2d_learn_land.1} parent=1 // pred_fallthru
      _
    // Predicated region
    $region6: #{custom_pad2d_learn_land.1} parent=1 // pred_check
      _
    $region7: #{custom_pad2d_learn_land.1} parent=1 // pred_check_branch
      %21 = sbr.rel (0) target = $region9
    $region8: #{custom_pad2d_learn_land.1} parent=1 // pred_region
      %23 = dma.done [#allocation3], 2048
    $region9: #{custom_pad2d_learn_land.1} parent=1 // pred_fallthru
      _
    %v24 = vld [vmem:[#allocation2] sm:$0xff]
    %v25 = vld [vmem:[#allocation2 + $0x8] sm:$0xff]
    %v26 = vld [vmem:[#allocation2 + $0x10] sm:$0xff]
    %v27 = vld [vmem:[#allocation2 + $0x18] sm:$0xff]
    %v28 = vld [vmem:[#allocation2 + $0x20] sm:$0xff]
    %v29 = vld [vmem:[#allocation2 + $0x28] sm:$0xff]
    %v30 = vld [vmem:[#allocation2 + $0x30] sm:$0xff]
    %v31 = vld [vmem:[#allocation2 + $0x38] sm:$0xff]
    %v32 = vld [vmem:[#allocation2 + $0x40] sm:$0xff]
    %v33 = vld [vmem:[#allocation2 + $0x48] sm:$0xff]
    %v34 = vld [vmem:[#allocation2 + $0x50] sm:$0xff]
    %v35 = vld [vmem:[#allocation2 + $0x58] sm:$0xff]
    %v36 = vld [vmem:[#allocation2 + $0x60] sm:$0xff]
    %v37 = vld [vmem:[#allocation2 + $0x68] sm:$0xff]
    %v38 = vld [vmem:[#allocation2 + $0x70] sm:$0xff]
    %v39 = vld [vmem:[#allocation2 + $0x78] sm:$0xff]
    %56 = vrot.lane.b32.xlu0 %v24, 113
    %v57 = vpop.permute.xlu0 %56
    %58 = vrot.lane.b32.xlu0 %v25, 113
    %v59 = vpop.permute.xlu0 %58
    %60 = vrot.lane.b32.xlu0 %v26, 113
    %v61 = vpop.permute.xlu0 %60
    %62 = vrot.lane.b32.xlu0 %v27, 113
    %v63 = vpop.permute.xlu0 %62
    %64 = vrot.lane.b32.xlu0 %v28, 113
    %v65 = vpop.permute.xlu0 %64
    %66 = vrot.lane.b32.xlu0 %v29, 113
    %v67 = vpop.permute.xlu0 %66
    %68 = vrot.lane.b32.xlu0 %v30, 113
    %v69 = vpop.permute.xlu0 %68
    %70 = vrot.lane.b32.xlu0 %v31, 113
    %v71 = vpop.permute.xlu0 %70
    %72 = vrot.lane.b32.xlu0 %v32, 113
    %v73 = vpop.permute.xlu0 %72
    %74 = vrot.lane.b32.xlu0 %v33, 113
    %v75 = vpop.permute.xlu0 %74
    %76 = vrot.lane.b32.xlu0 %v34, 113
    %v77 = vpop.permute.xlu0 %76
    %78 = vrot.lane.b32.xlu0 %v35, 113
    %v79 = vpop.permute.xlu0 %78
    %80 = vrot.lane.b32.xlu0 %v36, 113
    %v81 = vpop.permute.xlu0 %80
    %82 = vrot.lane.b32.xlu0 %v37, 113
    %v83 = vpop.permute.xlu0 %82
    %84 = vrot.lane.b32.xlu0 %v38, 113
    %v85 = vpop.permute.xlu0 %84
    %86 = vrot.lane.b32.xlu0 %v39, 113
    %v87 = vpop.permute.xlu0 %86
    %104 = vrot.lane.b32.xlu0 %v24, 1
    %v105 = vpop.permute.xlu0 %104
    %106 = vrot.lane.b32.xlu0 %v25, 1
    %v107 = vpop.permute.xlu0 %106
    %108 = vrot.lane.b32.xlu0 %v26, 1
    %v109 = vpop.permute.xlu0 %108
    %110 = vrot.lane.b32.xlu0 %v27, 1
    %v111 = vpop.permute.xlu0 %110
    %112 = vrot.lane.b32.xlu0 %v28, 1
    %v113 = vpop.permute.xlu0 %112
    %114 = vrot.lane.b32.xlu0 %v29, 1
    %v115 = vpop.permute.xlu0 %114
    %116 = vrot.lane.b32.xlu0 %v30, 1
    %v117 = vpop.permute.xlu0 %116
    %118 = vrot.lane.b32.xlu0 %v31, 1
    %v119 = vpop.permute.xlu0 %118
    %120 = vrot.lane.b32.xlu0 %v32, 1
    %v121 = vpop.permute.xlu0 %120
    %122 = vrot.lane.b32.xlu0 %v33, 1
    %v123 = vpop.permute.xlu0 %122
    %124 = vrot.lane.b32.xlu0 %v34, 1
    %v125 = vpop.permute.xlu0 %124
    %126 = vrot.lane.b32.xlu0 %v35, 1
    %v127 = vpop.permute.xlu0 %126
    %128 = vrot.lane.b32.xlu0 %v36, 1
    %v129 = vpop.permute.xlu0 %128
    %130 = vrot.lane.b32.xlu0 %v37, 1
    %v131 = vpop.permute.xlu0 %130
    %132 = vrot.lane.b32.xlu0 %v38, 1
    %v133 = vpop.permute.xlu0 %132
    %134 = vrot.lane.b32.xlu0 %v39, 1
    %v135 = vpop.permute.xlu0 %134
    %152 = vrot.lane.b32.xlu0 %v24, 17
    %v153 = vpop.permute.xlu0 %152
    %154 = vrot.lane.b32.xlu0 %v25, 17
    %v155 = vpop.permute.xlu0 %154
    %156 = vrot.lane.b32.xlu0 %v26, 17
    %v157 = vpop.permute.xlu0 %156
    %158 = vrot.lane.b32.xlu0 %v27, 17
    %v159 = vpop.permute.xlu0 %158
    %160 = vrot.lane.b32.xlu0 %v28, 17
    %v161 = vpop.permute.xlu0 %160
    %162 = vrot.lane.b32.xlu0 %v29, 17
    %v163 = vpop.permute.xlu0 %162
    %164 = vrot.lane.b32.xlu0 %v30, 17
    %v165 = vpop.permute.xlu0 %164
    %166 = vrot.lane.b32.xlu0 %v31, 17
    %v167 = vpop.permute.xlu0 %166
    %168 = vrot.lane.b32.xlu0 %v32, 17
    %v169 = vpop.permute.xlu0 %168
    %170 = vrot.lane.b32.xlu0 %v33, 17
    %v171 = vpop.permute.xlu0 %170
    %172 = vrot.lane.b32.xlu0 %v34, 17
    %v173 = vpop.permute.xlu0 %172
    %174 = vrot.lane.b32.xlu0 %v35, 17
    %v175 = vpop.permute.xlu0 %174
    %176 = vrot.lane.b32.xlu0 %v36, 17
    %v177 = vpop.permute.xlu0 %176
    %178 = vrot.lane.b32.xlu0 %v37, 17
    %v179 = vpop.permute.xlu0 %178
    %180 = vrot.lane.b32.xlu0 %v38, 17
    %v181 = vpop.permute.xlu0 %180
    %182 = vrot.lane.b32.xlu0 %v39, 17
    %v183 = vpop.permute.xlu0 %182
    %vm200 = vcmask 7168
    %v201 = vsel %vm200, %v57, %v105
    %v202 = vsel %vm200, %v59, %v107
    %v203 = vsel %vm200, %v61, %v109
    %v204 = vsel %vm200, %v63, %v111
    %v205 = vsel %vm200, %v65, %v113
    %v206 = vsel %vm200, %v67, %v115
    %v207 = vsel %vm200, %v69, %v117
    %v208 = vsel %vm200, %v71, %v119
    %v209 = vsel %vm200, %v73, %v121
    %v210 = vsel %vm200, %v75, %v123
    %v211 = vsel %vm200, %v77, %v125
    %v212 = vsel %vm200, %v79, %v127
    %v213 = vsel %vm200, %v81, %v129
    %v214 = vsel %vm200, %v83, %v131
    %v215 = vsel %vm200, %v85, %v133
    %v216 = vsel %vm200, %v87, %v135
    %vm217 = vcmask 138240
    %v218 = vsel %vm217, %v201, %v153
    %v219 = vsel %vm217, %v202, %v155
    %v220 = vsel %vm217, %v203, %v157
    %v221 = vsel %vm217, %v204, %v159
    %v222 = vsel %vm217, %v205, %v161
    %v223 = vsel %vm217, %v206, %v163
    %v224 = vsel %vm217, %v207, %v165
    %v225 = vsel %vm217, %v208, %v167
    %v226 = vsel %vm217, %v209, %v169
    %v227 = vsel %vm217, %v210, %v171
    %v228 = vsel %vm217, %v211, %v173
    %v229 = vsel %vm217, %v212, %v175
    %v230 = vsel %vm217, %v213, %v177
    %v231 = vsel %vm217, %v214, %v179
    %v232 = vsel %vm217, %v215, %v181
    %v233 = vsel %vm217, %v216, %v183
    %vm250 = vcmask 1040384
    %v251 = vrot.slane %v218, 7
    %v252 = vrot.slane %v219, 7
    %v253 = vsel %vm250, %v251, %v252
    %v254 = vrot.slane %v220, 7
    %v255 = vrot.slane %v221, 7
    %v256 = vsel %vm250, %v254, %v255
    %v257 = vrot.slane %v222, 7
    %v258 = vrot.slane %v223, 7
    %v259 = vsel %vm250, %v257, %v258
    %v260 = vrot.slane %v224, 7
    %v261 = vrot.slane %v225, 7
    %v262 = vsel %vm250, %v260, %v261
    %v263 = vrot.slane %v226, 7
    %v264 = vrot.slane %v227, 7
    %v265 = vsel %vm250, %v263, %v264
    %v266 = vrot.slane %v228, 7
    %v267 = vrot.slane %v229, 7
    %v268 = vsel %vm250, %v266, %v267
    %v269 = vrot.slane %v230, 7
    %v270 = vrot.slane %v231, 7
    %v271 = vsel %vm250, %v269, %v270
    %v272 = vrot.slane %v232, 7
    %v273 = vrot.slane %v233, 7
    %v274 = vsel %vm250, %v272, %v273
    %v299 = vsel %vm250, 0.0, %v251
    %v300 = vsel %vm250, 0.0, %v254
    %v301 = vsel %vm250, 0.0, %v257
    %v302 = vsel %vm250, 0.0, %v260
    %v303 = vsel %vm250, 0.0, %v263
    %v304 = vsel %vm250, 0.0, %v266
    %v305 = vsel %vm250, 0.0, %v269
    %v306 = vsel %vm250, 0.0, %v272
    %v307 = vsel %vm250, %v252, 0.0
    %v308 = vsel %vm250, %v255, 0.0
    %v309 = vsel %vm250, %v258, 0.0
    %v310 = vsel %vm250, %v261, 0.0
    %v311 = vsel %vm250, %v264, 0.0
    %v312 = vsel %vm250, %v267, 0.0
    %v313 = vsel %vm250, %v270, 0.0
    %v314 = vsel %vm250, %v273, 0.0
    %vm315 = vcmask 146432
    %316 = vst.msk [vmem:[%s1] sm:$0xff] %vm315, %v299
    %317 = vst.msk [vmem:[%s1 + $0x8] sm:$0xff] %vm315, %v253
    %vm318 = vcmask 140288
    %319 = vst.msk [vmem:[%s1 + $0x10] sm:$0x3] %vm318, %v307
    %320 = vst.msk [vmem:[%s1 + $0x18] sm:$0xff] %vm315, %v300
    %321 = vst.msk [vmem:[%s1 + $0x20] sm:$0xff] %vm315, %v256
    %322 = vst.msk [vmem:[%s1 + $0x28] sm:$0x3] %vm318, %v308
    %323 = vst.msk [vmem:[%s1 + $0x30] sm:$0xff] %vm315, %v301
    %324 = vst.msk [vmem:[%s1 + $0x38] sm:$0xff] %vm315, %v259
    %325 = vst.msk [vmem:[%s1 + $0x40] sm:$0x3] %vm318, %v309
    %326 = vst.msk [vmem:[%s1 + $0x48] sm:$0xff] %vm315, %v302
    %327 = vst.msk [vmem:[%s1 + $0x50] sm:$0xff] %vm315, %v262
    %328 = vst.msk [vmem:[%s1 + $0x58] sm:$0x3] %vm318, %v310
    %329 = vst.msk [vmem:[%s1 + $0x60] sm:$0xff] %vm315, %v303
    %330 = vst.msk [vmem:[%s1 + $0x68] sm:$0xff] %vm315, %v265
    %331 = vst.msk [vmem:[%s1 + $0x70] sm:$0x3] %vm318, %v311
    %332 = vst.msk [vmem:[%s1 + $0x78] sm:$0xff] %vm315, %v304
    %333 = vst.msk [vmem:[%s1 + $0x80] sm:$0xff] %vm315, %v268
    %334 = vst.msk [vmem:[%s1 + $0x88] sm:$0x3] %vm318, %v312
    %335 = vst.msk [vmem:[%s1 + $0x90] sm:$0xff] %vm315, %v305
    %336 = vst.msk [vmem:[%s1 + $0x98] sm:$0xff] %vm315, %v271
    %337 = vst.msk [vmem:[%s1 + $0xa0] sm:$0x3] %vm318, %v313
    %338 = vst.msk [vmem:[%s1 + $0xa8] sm:$0xff] %vm315, %v306
    %339 = vst.msk [vmem:[%s1 + $0xb0] sm:$0xff] %vm315, %v274
    %340 = vst.msk [vmem:[%s1 + $0xb8] sm:$0x3] %vm318, %v314
    // Predicated region
    $region10: #{custom_pad2d_learn_land.1} parent=1 // pred_check
      _
    $region11: #{custom_pad2d_learn_land.1} parent=1 // pred_check_branch
      %342 = sbr.rel (0) target = $region13
    $region12: #{custom_pad2d_learn_land.1} parent=1 // pred_region
      _
    $region13: #{custom_pad2d_learn_land.1} parent=1 // pred_fallthru
      _
    // Predicated region
    $region14: #{custom_pad2d_learn_land.1} parent=1 // pred_check
      _
    $region15: #{custom_pad2d_learn_land.1} parent=1 // pred_check_branch
      %344 = sbr.rel (0) target = $region17
    $region16: #{custom_pad2d_learn_land.1} parent=1 // pred_region
      _
    $region17: #{custom_pad2d_learn_land.1} parent=1 // pred_fallthru
      _
    %345 = vsyncpa [#allocation3], 1

</llo_original>
